<compile_context>
chip_gen: v5e
topology: v5e:2x2
jax: 0.10.0
libtpu: 0.0.40
codegen_flags: <defaults>
</compile_context>

<pallas_src>
import jax
import jax.numpy as jnp
from jax.experimental import pallas as pl
from jax.experimental.pallas import tpu as pltpu


def _round_up(x: int, m: int) -> int:
    return ((x + m - 1) // m) * m


def actor_kernel(x_ref, w1_ref, b1_ref, w2_ref, b2_ref,
                 w3_ref, b3_ref, w4_ref, b4_ref, o_ref):
    # Layer 1: Linear(8 -> 512pad) + ReLU
    h = jnp.dot(x_ref[...].astype(jnp.bfloat16), w1_ref[...],
                preferred_element_type=jnp.float32)
    h = jnp.maximum(h + b1_ref[...], 0.0)
    # Layer 2: Linear(512pad -> 256pad) + ReLU
    h = jnp.dot(h.astype(jnp.bfloat16), w2_ref[...],
                preferred_element_type=jnp.float32)
    h = jnp.maximum(h + b2_ref[...], 0.0)
    # Layer 3: Linear(256pad -> 256pad) + ReLU
    h = jnp.dot(h.astype(jnp.bfloat16), w3_ref[...],
                preferred_element_type=jnp.float32)
    h = jnp.maximum(h + b3_ref[...], 0.0)
    # Layer 4: Linear(256pad -> n_actions) + Tanh
    h = jnp.dot(h.astype(jnp.bfloat16), w4_ref[...],
                preferred_element_type=jnp.float32)
    o_ref[...] = jnp.tanh(h + b4_ref[...])


def ddpg_actor_forward(x, params):
    """x: [batch, n_inputs] f32; params: dict of (w1,b1,...,w4,b4).

    Weights are bf16 [in, out] (zero-padded to lane-aligned widths); biases f32 [1, out].
    """
    w1, b1, w2, b2, w3, b3, w4, b4 = (
        params["w1"], params["b1"], params["w2"], params["b2"],
        params["w3"], params["b3"], params["w4"], params["b4"])
    batch, n_in = x.shape
    n_actions = w4.shape[1]

    # Sublane-align the batch dimension; tile large batches at 256 rows/step.
    pad_b = _round_up(max(batch, 8), 8)
    if pad_b > 256:
        pad_b = _round_up(pad_b, 256)
        tile_b = 256
    else:
        tile_b = pad_b
    if pad_b != batch:
        x = jnp.pad(x, ((0, pad_b - batch), (0, 0)))

    grid = (pad_b // tile_b,)
    const2 = lambda i: (0, 0)  # weights/biases: same (full) block every step -> VMEM resident

    out = pl.pallas_call(
        actor_kernel,
        out_shape=jax.ShapeDtypeStruct((pad_b, n_actions), jnp.float32),
        grid=grid,
        in_specs=[
            pl.BlockSpec((tile_b, n_in), lambda i: (i, 0)),
            pl.BlockSpec(w1.shape, const2), pl.BlockSpec(b1.shape, const2),
            pl.BlockSpec(w2.shape, const2), pl.BlockSpec(b2.shape, const2),
            pl.BlockSpec(w3.shape, const2), pl.BlockSpec(b3.shape, const2),
            pl.BlockSpec(w4.shape, const2), pl.BlockSpec(b4.shape, const2),
        ],
        out_specs=pl.BlockSpec((tile_b, n_actions), lambda i: (i, 0)),
        compiler_params=pltpu.CompilerParams(
            dimension_semantics=("parallel",),
            vmem_limit_bytes=8 * 1024 * 1024,
        ),
    )(x, w1, b1, w2, b2, w3, b3, w4, b4)
    return out[:batch]


def init_params(key, n_inputs=8, n_actions=2, neuron_nums=(400, 200, 200)):
    """Deterministic init mimicking torch.nn.Linear default (uniform +/- 1/sqrt(fan_in)).

    Weights stored as [in, out] (transposed vs. torch), zero-padded so the
    hidden widths are multiples of 128 (400->512, 200->256), and cast to bf16.
    Padded rows/cols/bias entries are exactly zero, so ReLU(0)=0 keeps the
    padded lanes inert through every layer; the true input/output widths
    (n_inputs, n_actions) are left unpadded.
    """
    true_dims = [n_inputs, neuron_nums[0], neuron_nums[1], neuron_nums[2], n_actions]
    pad_dims = [n_inputs] + [_round_up(n, 128) for n in neuron_nums] + [n_actions]
    params = {}
    keys = jax.random.split(key, 8)
    for i in range(4):
        fan_in, fan_out = true_dims[i], true_dims[i + 1]
        p_in, p_out = pad_dims[i], pad_dims[i + 1]
        bound = float(1.0 / (fan_in ** 0.5))
        w = jax.random.uniform(keys[2 * i], (fan_in, fan_out), jnp.float32, -bound, bound)
        b = jax.random.uniform(keys[2 * i + 1], (1, fan_out), jnp.float32, -bound, bound)
        w_pad = jnp.zeros((p_in, p_out), jnp.float32).at[:fan_in, :fan_out].set(w)
        b_pad = jnp.zeros((1, p_out), jnp.float32).at[:, :fan_out].set(b)
        params[f"w{i+1}"] = w_pad.astype(jnp.bfloat16)   # bf16 weights in HBM
        params[f"b{i+1}"] = b_pad                        # f32 biases
    return params


def reference_emulated(x, p):
    """Pure-JAX reference that emulates the kernel's exact bf16 dot behaviour."""
    h = x
    for i in range(1, 5):
        h = jnp.dot(h.astype(jnp.bfloat16), p[f"w{i}"],
                    preferred_element_type=jnp.float32) + p[f"b{i}"]
        h = jnp.maximum(h, 0.0) if i < 4 else jnp.tanh(h)
    return h


def reference_f32(x, p):
    """Full-precision reference for semantic fidelity (bf16 quantization noise only)."""
    h = x
    for i in range(1, 5):
        h = h @ p[f"w{i}"].astype(jnp.float32) + p[f"b{i}"]
        h = jnp.maximum(h, 0.0) if i < 4 else jnp.tanh(h)
    return h


if __name__ == "__main__":
    key = jax.random.PRNGKey(0)
    k_params, k_x = jax.random.split(key)

    batch, n_inputs, n_actions = 2, 8, 2
    params = init_params(k_params, n_inputs=n_inputs, n_actions=n_actions)
    x = jax.random.normal(k_x, (batch, n_inputs), jnp.float32)

    out = jax.block_until_ready(ddpg_actor_forward(x, params))
    assert out.shape == (batch, n_actions)

    ref_exact = reference_emulated(x, params)
    ref_full = reference_f32(x, params)
    assert jnp.allclose(out, ref_exact, atol=1e-4, rtol=1e-4), "mismatch vs bf16-emulated reference"
    assert jnp.allclose(out, ref_full, atol=5e-2, rtol=5e-2), "mismatch vs f32 reference"
    print("KERNEL_OK")
</pallas_src>

<mosaic_0001>
module attributes {stable_mosaic.version = 11 : i64} {
  func.func @actor_kernel(%arg0: i32, %arg1: memref<8x8xf32, #tpu.memory_space<vmem>>, %arg2: memref<8x512xbf16, #tpu.memory_space<vmem>>, %arg3: memref<1x512xf32, #tpu.memory_space<vmem>>, %arg4: memref<512x256xbf16, #tpu.memory_space<vmem>>, %arg5: memref<1x256xf32, #tpu.memory_space<vmem>>, %arg6: memref<256x256xbf16, #tpu.memory_space<vmem>>, %arg7: memref<1x256xf32, #tpu.memory_space<vmem>>, %arg8: memref<256x2xbf16, #tpu.memory_space<vmem>>, %arg9: memref<1x2xf32, #tpu.memory_space<vmem>>, %arg10: memref<8x2xf32, #tpu.memory_space<vmem>>) attributes {dimension_semantics = [#tpu.dimension_semantics<parallel>], iteration_bounds = array<i64: 1>, scalar_prefetch = 0 : i64, scratch_operands = 0 : i64, tpu.core_type = #tpu.core_type<tc>, window_params = [{transform_indices = @transform_0, window_bounds = array<i64: 8, 8>}, {pipeline_mode = #tpu.pipeline_mode<synchronous>, transform_indices = @transform_1, window_bounds = array<i64: 8, 512>}, {pipeline_mode = #tpu.pipeline_mode<synchronous>, transform_indices = @transform_2, window_bounds = array<i64: 1, 512>}, {pipeline_mode = #tpu.pipeline_mode<synchronous>, transform_indices = @transform_3, window_bounds = array<i64: 512, 256>}, {pipeline_mode = #tpu.pipeline_mode<synchronous>, transform_indices = @transform_4, window_bounds = array<i64: 1, 256>}, {pipeline_mode = #tpu.pipeline_mode<synchronous>, transform_indices = @transform_5, window_bounds = array<i64: 256, 256>}, {pipeline_mode = #tpu.pipeline_mode<synchronous>, transform_indices = @transform_6, window_bounds = array<i64: 1, 256>}, {pipeline_mode = #tpu.pipeline_mode<synchronous>, transform_indices = @transform_7, window_bounds = array<i64: 256, 2>}, {pipeline_mode = #tpu.pipeline_mode<synchronous>, transform_indices = @transform_8, window_bounds = array<i64: 1, 2>}, {transform_indices = @transform_9, window_bounds = array<i64: 8, 2>}]} {
    %c0 = arith.constant 0 : index
    %c0_0 = arith.constant 0 : index
    %0 = vector.load %arg1[%c0, %c0_0] : memref<8x8xf32, #tpu.memory_space<vmem>>, vector<8x8xf32>
    %1 = arith.truncf %0 : vector<8x8xf32> to vector<8x8xbf16>
    %c0_1 = arith.constant 0 : index
    %c0_2 = arith.constant 0 : index
    %2 = vector.load %arg2[%c0_1, %c0_2] : memref<8x512xbf16, #tpu.memory_space<vmem>>, vector<8x512xbf16>
    %cst = arith.constant dense<0.000000e+00> : vector<8x512xf32>
    %3 = tpu.matmul %1, %2, %cst {dimension_numbers = #tpu.dot_dimension_numbers<[1], [0], [0], [1], [0, 0, 1, 1], [], []>} : vector<8x8xbf16>, vector<8x512xbf16>, vector<8x512xf32> -> vector<8x512xf32>
    %c0_3 = arith.constant 0 : index
    %c0_4 = arith.constant 0 : index
    %4 = vector.load %arg3[%c0_3, %c0_4] : memref<1x512xf32, #tpu.memory_space<vmem>>, vector<1x512xf32>
    %5 = vector.broadcast %4 : vector<1x512xf32> to vector<8x512xf32>
    %6 = arith.addf %3, %5 : vector<8x512xf32>
    %cst_5 = arith.constant 0.000000e+00 : f32
    %7 = vector.broadcast %cst_5 : f32 to vector<8x512xf32>
    %8 = arith.maximumf %6, %7 : vector<8x512xf32>
    %9 = arith.truncf %8 : vector<8x512xf32> to vector<8x512xbf16>
    %c0_6 = arith.constant 0 : index
    %c0_7 = arith.constant 0 : index
    %10 = vector.load %arg4[%c0_6, %c0_7] : memref<512x256xbf16, #tpu.memory_space<vmem>>, vector<512x256xbf16>
    %cst_8 = arith.constant dense<0.000000e+00> : vector<8x256xf32>
    %11 = tpu.matmul %9, %10, %cst_8 {dimension_numbers = #tpu.dot_dimension_numbers<[1], [0], [0], [1], [0, 0, 1, 1], [], []>} : vector<8x512xbf16>, vector<512x256xbf16>, vector<8x256xf32> -> vector<8x256xf32>
    %c0_9 = arith.constant 0 : index
    %c0_10 = arith.constant 0 : index
    %12 = vector.load %arg5[%c0_9, %c0_10] : memref<1x256xf32, #tpu.memory_space<vmem>>, vector<1x256xf32>
    %13 = vector.broadcast %12 : vector<1x256xf32> to vector<8x256xf32>
    %14 = arith.addf %11, %13 : vector<8x256xf32>
    %cst_11 = arith.constant 0.000000e+00 : f32
    %15 = vector.broadcast %cst_11 : f32 to vector<8x256xf32>
    %16 = arith.maximumf %14, %15 : vector<8x256xf32>
    %17 = arith.truncf %16 : vector<8x256xf32> to vector<8x256xbf16>
    %c0_12 = arith.constant 0 : index
    %c0_13 = arith.constant 0 : index
    %18 = vector.load %arg6[%c0_12, %c0_13] : memref<256x256xbf16, #tpu.memory_space<vmem>>, vector<256x256xbf16>
    %cst_14 = arith.constant dense<0.000000e+00> : vector<8x256xf32>
    %19 = tpu.matmul %17, %18, %cst_14 {dimension_numbers = #tpu.dot_dimension_numbers<[1], [0], [0], [1], [0, 0, 1, 1], [], []>} : vector<8x256xbf16>, vector<256x256xbf16>, vector<8x256xf32> -> vector<8x256xf32>
    %c0_15 = arith.constant 0 : index
    %c0_16 = arith.constant 0 : index
    %20 = vector.load %arg7[%c0_15, %c0_16] : memref<1x256xf32, #tpu.memory_space<vmem>>, vector<1x256xf32>
    %21 = vector.broadcast %20 : vector<1x256xf32> to vector<8x256xf32>
    %22 = arith.addf %19, %21 : vector<8x256xf32>
    %cst_17 = arith.constant 0.000000e+00 : f32
    %23 = vector.broadcast %cst_17 : f32 to vector<8x256xf32>
    %24 = arith.maximumf %22, %23 : vector<8x256xf32>
    %25 = arith.truncf %24 : vector<8x256xf32> to vector<8x256xbf16>
    %c0_18 = arith.constant 0 : index
    %c0_19 = arith.constant 0 : index
    %26 = vector.load %arg8[%c0_18, %c0_19] : memref<256x2xbf16, #tpu.memory_space<vmem>>, vector<256x2xbf16>
    %cst_20 = arith.constant dense<0.000000e+00> : vector<8x2xf32>
    %27 = tpu.matmul %25, %26, %cst_20 {dimension_numbers = #tpu.dot_dimension_numbers<[1], [0], [0], [1], [0, 0, 1, 1], [], []>} : vector<8x256xbf16>, vector<256x2xbf16>, vector<8x2xf32> -> vector<8x2xf32>
    %c0_21 = arith.constant 0 : index
    %c0_22 = arith.constant 0 : index
    %28 = vector.load %arg9[%c0_21, %c0_22] : memref<1x2xf32, #tpu.memory_space<vmem>>, vector<1x2xf32>
    %29 = vector.broadcast %28 : vector<1x2xf32> to vector<8x2xf32>
    %30 = arith.addf %27, %29 : vector<8x2xf32>
    %31 = math.tanh %30 : vector<8x2xf32>
    %c0_23 = arith.constant 0 : index
    %c0_24 = arith.constant 0 : index
    %32 = vector.load %arg10[%c0_23, %c0_24] : memref<8x2xf32, #tpu.memory_space<vmem>>, vector<8x2xf32>
    tpu.vector_store %arg10[%c0_23, %c0_24], %31 {strides = array<i32>} : memref<8x2xf32, #tpu.memory_space<vmem>>, vector<8x2xf32>,
    return
  }
  func.func @transform_0(%arg0: i32) -> (i32, i32) {
    %c0_i32 = arith.constant 0 : i32
    %c0_i32_0 = arith.constant 0 : i32
    return %arg0, %c0_i32 : i32, i32
  }
  func.func @transform_1(%arg0: i32) -> (i32, i32) {
    %c0_i32 = arith.constant 0 : i32
    %c0_i32_0 = arith.constant 0 : i32
    %c0_i32_1 = arith.constant 0 : i32
    return %c0_i32, %c0_i32_0 : i32, i32
  }
  func.func @transform_2(%arg0: i32) -> (i32, i32) {
    %c0_i32 = arith.constant 0 : i32
    %c0_i32_0 = arith.constant 0 : i32
    %c0_i32_1 = arith.constant 0 : i32
    return %c0_i32, %c0_i32_0 : i32, i32
  }
  func.func @transform_3(%arg0: i32) -> (i32, i32) {
    %c0_i32 = arith.constant 0 : i32
    %c0_i32_0 = arith.constant 0 : i32
    %c0_i32_1 = arith.constant 0 : i32
    return %c0_i32, %c0_i32_0 : i32, i32
  }
  func.func @transform_4(%arg0: i32) -> (i32, i32) {
    %c0_i32 = arith.constant 0 : i32
    %c0_i32_0 = arith.constant 0 : i32
    %c0_i32_1 = arith.constant 0 : i32
    return %c0_i32, %c0_i32_0 : i32, i32
  }
  func.func @transform_5(%arg0: i32) -> (i32, i32) {
    %c0_i32 = arith.constant 0 : i32
    %c0_i32_0 = arith.constant 0 : i32
    %c0_i32_1 = arith.constant 0 : i32
    return %c0_i32, %c0_i32_0 : i32, i32
  }
  func.func @transform_6(%arg0: i32) -> (i32, i32) {
    %c0_i32 = arith.constant 0 : i32
    %c0_i32_0 = arith.constant 0 : i32
    %c0_i32_1 = arith.constant 0 : i32
    return %c0_i32, %c0_i32_0 : i32, i32
  }
  func.func @transform_7(%arg0: i32) -> (i32, i32) {
    %c0_i32 = arith.constant 0 : i32
    %c0_i32_0 = arith.constant 0 : i32
    %c0_i32_1 = arith.constant 0 : i32
    return %c0_i32, %c0_i32_0 : i32, i32
  }
  func.func @transform_8(%arg0: i32) -> (i32, i32) {
    %c0_i32 = arith.constant 0 : i32
    %c0_i32_0 = arith.constant 0 : i32
    %c0_i32_1 = arith.constant 0 : i32
    return %c0_i32, %c0_i32_0 : i32, i32
  }
  func.func @transform_9(%arg0: i32) -> (i32, i32) {
    %c0_i32 = arith.constant 0 : i32
    %c0_i32_0 = arith.constant 0 : i32
    return %arg0, %c0_i32 : i32, i32
  }
}

</mosaic_0001>

<llo_original>
// kernel: tpu_custom_call.1
$region0: #{tpu_custom_call.1}
  #allocation0 [shape = 'u32[]', space=smem, size = 0x4, offset = 0x4, fixed_abs, tag = 'smem constant byte address 0x4 - core index']
  #allocation1 [shape = 'u32[72,128]{1,0:T(1,128)}', space=vmem, size = 0x9000, scoped, tag = 'internal scratch']
  %s0 = inlined_call_operand.vmem [shape: f32[8,8], index: 0, kind: input, shape index: {}]
  %s1 = inlined_call_operand.vmem [shape: bf16[8,512], index: 1, kind: input, shape index: {}]
  %s2 = inlined_call_operand.vmem [shape: f32[1,512], index: 2, kind: input, shape index: {}]
  %s3 = inlined_call_operand.hbm [shape: bf16[512,256], index: 3, kind: input, shape index: {}]
  %s4 = inlined_call_operand.vmem [shape: f32[1,256], index: 4, kind: input, shape index: {}]
  %s5 = inlined_call_operand.hbm [shape: bf16[256,256], index: 5, kind: input, shape index: {}]
  %s6 = inlined_call_operand.vmem [shape: f32[1,256], index: 6, kind: input, shape index: {}]
  %s7 = inlined_call_operand.vmem [shape: bf16[256,2], index: 7, kind: input, shape index: {}]
  %s8 = inlined_call_operand.vmem [shape: f32[1,2], index: 8, kind: input, shape index: {}]
  %s9 = inlined_call_operand.vmem [shape: f32[8,2], index: 9, kind: output, shape index: {}]
  %s10 = sld [smem:[#allocation0]]
  $region54: #{tpu_custom_call.1} parent=0
    _
  %s12 = ssub.s32 1, %s10
  %s13 = scalar_select 0, %s12, %s10
  $region1: #{tpu_custom_call.1} parent=0
    #allocation2 [shape = 'u8[262144]{0}', space=vmem, size = 0x40000, scoped, tag = 'input window, operand 3, single buffered']
    #allocation3 [shape = 's32[1]{0}', space=sflag, size = 0x4, scoped, tag = 'scoped memory for tpu_custom_call.1']
    #allocation4 [shape = 'u8[131072]{0}', space=vmem, size = 0x20000, scoped, tag = 'input window, operand 5, single buffered']
    #allocation5 [shape = 's32[1]{0}', space=sflag, size = 0x4, scoped, tag = 'scoped memory for tpu_custom_call.1']
    %14 = vsyncpa [#allocation3], 0
    %15 = vsyncpa [#allocation5], 0
    // Predicated region
    $region2: #{tpu_custom_call.1} parent=1 // pred_check
      _
    $region3: #{tpu_custom_call.1} parent=1 // pred_check_branch
      %17 = sbr.rel (0) target = $region5
    $region4: #{tpu_custom_call.1} parent=1 // pred_region
      _
    $region5: #{tpu_custom_call.1} parent=1 // pred_fallthru
      _
    // Predicated region
    $region6: #{tpu_custom_call.1} parent=1 // pred_check
      _
    $region7: #{tpu_custom_call.1} parent=1 // pred_check_branch
      %19 = sbr.rel (0) target = $region9
    $region8: #{tpu_custom_call.1} parent=1 // pred_region
      _
    $region9: #{tpu_custom_call.1} parent=1 // pred_fallthru
      _
    // Predicated region
    $region10: #{tpu_custom_call.1} parent=1 // pred_check
      _
    $region11: #{tpu_custom_call.1} parent=1 // pred_check_branch
      %21 = sbr.rel (0) target = $region13
    $region12: #{tpu_custom_call.1} parent=1 // pred_region
      _
    $region13: #{tpu_custom_call.1} parent=1 // pred_fallthru
      _
    // Predicated region
    $region14: #{tpu_custom_call.1} parent=1 // pred_check
      _
    $region15: #{tpu_custom_call.1} parent=1 // pred_check_branch
      %23 = sbr.rel (0) target = $region17
    $region16: #{tpu_custom_call.1} parent=1 // pred_region
      %25 = vsyncadd [#allocation3], 0
      %s26 = sshll.u32 %s3, 4
      %s27 = int_to_ptr.hbm [resolvable:$true] %s26
      %s28 = sshll.u32 [#allocation2], 4
      %s29 = int_to_ptr.vmem [resolvable:$true] %s28
      %34 = dma.hbm_to_vmem [thread:$0]  %s27, 8192, %s29, [#allocation3], 128, 128, 8
    $region17: #{tpu_custom_call.1} parent=1 // pred_fallthru
      _
    // Predicated region
    $region18: #{tpu_custom_call.1} parent=1 // pred_check
      _
    $region19: #{tpu_custom_call.1} parent=1 // pred_check_branch
      %36 = sbr.rel (0) target = $region21
    $region20: #{tpu_custom_call.1} parent=1 // pred_region
      _
    $region21: #{tpu_custom_call.1} parent=1 // pred_fallthru
      _
    // Predicated region
    $region22: #{tpu_custom_call.1} parent=1 // pred_check
      _
    $region23: #{tpu_custom_call.1} parent=1 // pred_check_branch
      %38 = sbr.rel (0) target = $region25
    $region24: #{tpu_custom_call.1} parent=1 // pred_region
      %40 = vsyncadd [#allocation5], 0
      %s41 = sshll.u32 %s5, 4
      %s42 = int_to_ptr.hbm [resolvable:$true] %s41
      %s43 = sshll.u32 [#allocation4], 4
      %s44 = int_to_ptr.vmem [resolvable:$true] %s43
      %49 = dma.hbm_to_vmem [thread:$0]  %s42, 4096, %s44, [#allocation5], 128, 128, 8
    $region25: #{tpu_custom_call.1} parent=1 // pred_fallthru
      _
    // Predicated region
    $region26: #{tpu_custom_call.1} parent=1 // pred_check
      _
    $region27: #{tpu_custom_call.1} parent=1 // pred_check_branch
      %51 = sbr.rel (0) target = $region29
    $region28: #{tpu_custom_call.1} parent=1 // pred_region
      _
    $region29: #{tpu_custom_call.1} parent=1 // pred_fallthru
      _
    // Predicated region
    $region30: #{tpu_custom_call.1} parent=1 // pred_check
      _
    $region31: #{tpu_custom_call.1} parent=1 // pred_check_branch
      %53 = sbr.rel (0) target = $region33
    $region32: #{tpu_custom_call.1} parent=1 // pred_region
      _
    $region33: #{tpu_custom_call.1} parent=1 // pred_fallthru
      _
    // Predicated region
    $region34: #{tpu_custom_call.1} parent=1 // pred_check
      _
    $region35: #{tpu_custom_call.1} parent=1 // pred_check_branch
      %55 = sbr.rel (0) target = $region37
    $region36: #{tpu_custom_call.1} parent=1 // pred_region
      _
    $region37: #{tpu_custom_call.1} parent=1 // pred_fallthru
      _
    // Predicated region
    $region38: #{tpu_custom_call.1} parent=1 // pred_check
      _
    $region39: #{tpu_custom_call.1} parent=1 // pred_check_branch
      %57 = sbr.rel (0) target = $region41
    $region40: #{tpu_custom_call.1} parent=1 // pred_region
      %59 = dma.done [#allocation3], 8192
    $region41: #{tpu_custom_call.1} parent=1 // pred_fallthru
      _
    // Predicated region
    $region42: #{tpu_custom_call.1} parent=1 // pred_check
      _
    $region43: #{tpu_custom_call.1} parent=1 // pred_check_branch
      %61 = sbr.rel (0) target = $region45
    $region44: #{tpu_custom_call.1} parent=1 // pred_region
      %63 = dma.done [#allocation5], 4096
    $region45: #{tpu_custom_call.1} parent=1 // pred_fallthru
      _
    %v65 = vld [vmem:[%s0] sm:$0xff]
    %v66 = vpack.c.bf16 %v65, %v65
    %v67 = vld [vmem:[%s1] sm:$0xff]
    %v68 = vld [vmem:[%s1 + $0x8] sm:$0xff]
    %v69 = vld [vmem:[%s2] sm:$0xf]
    %v71 = vperm.slane %v69, 0
    %v72 = vperm.slane %v69, 1
    %v73 = vperm.slane %v69, 2
    %v74 = vperm.slane %v69, 3
    %v81 = vunpack.c.l.b16 %v67
    %v82 = vunpack.c.h.b16 %v67
    %v83 = vunpack.c.l.b16 %v68
    %v84 = vunpack.c.h.b16 %v68
    %v85 = vpack.c.b16 %v81, %v81
    %v86 = vpack.c.b16 %v82, %v82
    %v87 = vpack.c.b16 %v83, %v83
    %v88 = vpack.c.b16 %v84, %v84
    %vm89 = vcmask 64512
    %v91 = vsel %vm89, %v66, 0
    %vm93 = vcmask 1043456
    %v95 = vsel %vm93, %v85, 0
    %v98 = vsel %vm93, %v86, 0
    %v101 = vsel %vm93, %v87, 0
    %v104 = vsel %vm93, %v88, 0
    %106 = vmatpush.bf16.msra.mxu0 0
    %107 = vmatpush.bf16.msra.mxu0 0
    %108 = vmatpush.bf16.msra.mxu0 0
    %109 = vmatpush.bf16.msra.mxu0 0
    %110 = vmatpush.bf16.msra.mxu0 0
    %111 = vmatpush.bf16.msra.mxu0 0
    %112 = vmatpush.bf16.msra.mxu0 0
    %113 = vmatpush.bf16.msra.mxu0 %v95
    %114 = vmatmul.bf16.gmra.mxu0 %v91
    %v115 = vpop.f32.mrf.mxu0
    %v116 = vadd.f32 %v71, %v115
    %v117 = vpop.f32.mrf.mxu0
    %118 = vdwg.mxu0
    %119 = vmatpush.bf16.msra.mxu0 0
    %120 = vmatpush.bf16.msra.mxu0 0
    %121 = vmatpush.bf16.msra.mxu0 0
    %122 = vmatpush.bf16.msra.mxu0 0
    %123 = vmatpush.bf16.msra.mxu0 0
    %124 = vmatpush.bf16.msra.mxu0 0
    %125 = vmatpush.bf16.msra.mxu0 0
    %126 = vmatpush.bf16.msra.mxu0 %v98
    %127 = vmatmul.bf16.gmra.mxu0 %v91
    %v128 = vpop.f32.mrf.mxu0
    %v129 = vadd.f32 %v72, %v128
    %v130 = vpop.f32.mrf.mxu0
    %131 = vdwg.mxu0
    %132 = vmatpush.bf16.msra.mxu0 0
    %133 = vmatpush.bf16.msra.mxu0 0
    %134 = vmatpush.bf16.msra.mxu0 0
    %135 = vmatpush.bf16.msra.mxu0 0
    %136 = vmatpush.bf16.msra.mxu0 0
    %137 = vmatpush.bf16.msra.mxu0 0
    %138 = vmatpush.bf16.msra.mxu0 0
    %139 = vmatpush.bf16.msra.mxu0 %v101
    %140 = vmatmul.bf16.gmra.mxu0 %v91
    %v141 = vpop.f32.mrf.mxu0
    %v142 = vadd.f32 %v73, %v141
    %v143 = vpop.f32.mrf.mxu0
    %144 = vdwg.mxu0
    %145 = vmatpush.bf16.msra.mxu0 0
    %146 = vmatpush.bf16.msra.mxu0 0
    %147 = vmatpush.bf16.msra.mxu0 0
    %148 = vmatpush.bf16.msra.mxu0 0
    %149 = vmatpush.bf16.msra.mxu0 0
    %150 = vmatpush.bf16.msra.mxu0 0
    %151 = vmatpush.bf16.msra.mxu0 0
    %152 = vmatpush.bf16.msra.mxu0 %v104
    %153 = vmatmul.bf16.gmra.mxu0 %v91
    %v154 = vpop.f32.mrf.mxu0
    %v155 = vadd.f32 %v74, %v154
    %v156 = vpop.f32.mrf.mxu0
    %157 = vdwg.mxu0
    %v158 = vmax.f32 %v116, 0.0
    %v159 = vmax.f32 %v129, 0.0
    %v160 = vmax.f32 %v142, 0.0
    %v161 = vmax.f32 %v155, 0.0
    %v162 = vpack.c.bf16 %v158, %v158
    %v163 = vpack.c.bf16 %v159, %v159
    %v164 = vpack.c.bf16 %v160, %v160
    %v165 = vpack.c.bf16 %v161, %v161
    %v166 = vld [vmem:[#allocation2] sm:$0xff]
    %v167 = vld [vmem:[#allocation2 + $0x8] sm:$0xff]
    %v168 = vld [vmem:[#allocation2 + $0x10] sm:$0xff]
    %v169 = vld [vmem:[#allocation2 + $0x18] sm:$0xff]
    %v170 = vld [vmem:[#allocation2 + $0x20] sm:$0xff]
    %v171 = vld [vmem:[#allocation2 + $0x28] sm:$0xff]
    %v172 = vld [vmem:[#allocation2 + $0x30] sm:$0xff]
    %v173 = vld [vmem:[#allocation2 + $0x38] sm:$0xff]
    %v174 = vld [vmem:[#allocation2 + $0x40] sm:$0xff]
    %v175 = vld [vmem:[#allocation2 + $0x48] sm:$0xff]
    %v176 = vld [vmem:[#allocation2 + $0x50] sm:$0xff]
    %v177 = vld [vmem:[#allocation2 + $0x58] sm:$0xff]
    %v178 = vld [vmem:[#allocation2 + $0x60] sm:$0xff]
    %v179 = vld [vmem:[#allocation2 + $0x68] sm:$0xff]
    %v180 = vld [vmem:[#allocation2 + $0x70] sm:$0xff]
    %v181 = vld [vmem:[#allocation2 + $0x78] sm:$0xff]
    %v182 = vld [vmem:[#allocation2 + $0x80] sm:$0xff]
    %v183 = vld [vmem:[#allocation2 + $0x88] sm:$0xff]
    %v184 = vld [vmem:[#allocation2 + $0x90] sm:$0xff]
    %v185 = vld [vmem:[#allocation2 + $0x98] sm:$0xff]
    %v186 = vld [vmem:[#allocation2 + $0xa0] sm:$0xff]
    %v187 = vld [vmem:[#allocation2 + $0xa8] sm:$0xff]
    %v188 = vld [vmem:[#allocation2 + $0xb0] sm:$0xff]
    %v189 = vld [vmem:[#allocation2 + $0xb8] sm:$0xff]
    %v190 = vld [vmem:[#allocation2 + $0xc0] sm:$0xff]
    %v191 = vld [vmem:[#allocation2 + $0xc8] sm:$0xff]
    %v192 = vld [vmem:[#allocation2 + $0xd0] sm:$0xff]
    %v193 = vld [vmem:[#allocation2 + $0xd8] sm:$0xff]
    %v194 = vld [vmem:[#allocation2 + $0xe0] sm:$0xff]
    %v195 = vld [vmem:[#allocation2 + $0xe8] sm:$0xff]
    %v196 = vld [vmem:[#allocation2 + $0xf0] sm:$0xff]
    %v197 = vld [vmem:[#allocation2 + $0xf8] sm:$0xff]
    %v198 = vld [vmem:[#allocation2 + $0x100] sm:$0xff]
    %v199 = vld [vmem:[#allocation2 + $0x108] sm:$0xff]
    %v200 = vld [vmem:[#allocation2 + $0x110] sm:$0xff]
    %v201 = vld [vmem:[#allocation2 + $0x118] sm:$0xff]
    %v202 = vld [vmem:[#allocation2 + $0x120] sm:$0xff]
    %v203 = vld [vmem:[#allocation2 + $0x128] sm:$0xff]
    %v204 = vld [vmem:[#allocation2 + $0x130] sm:$0xff]
    %v205 = vld [vmem:[#allocation2 + $0x138] sm:$0xff]
    %v206 = vld [vmem:[#allocation2 + $0x140] sm:$0xff]
    %v207 = vld [vmem:[#allocation2 + $0x148] sm:$0xff]
    %v208 = vld [vmem:[#allocation2 + $0x150] sm:$0xff]
    %v209 = vld [vmem:[#allocation2 + $0x158] sm:$0xff]
    %v210 = vld [vmem:[#allocation2 + $0x160] sm:$0xff]
    %v211 = vld [vmem:[#allocation2 + $0x168] sm:$0xff]
    %v212 = vld [vmem:[#allocation2 + $0x170] sm:$0xff]
    %v213 = vld [vmem:[#allocation2 + $0x178] sm:$0xff]
    %v214 = vld [vmem:[#allocation2 + $0x180] sm:$0xff]
    %v215 = vld [vmem:[#allocation2 + $0x188] sm:$0xff]
    %v216 = vld [vmem:[#allocation2 + $0x190] sm:$0xff]
    %v217 = vld [vmem:[#allocation2 + $0x198] sm:$0xff]
    %v218 = vld [vmem:[#allocation2 + $0x1a0] sm:$0xff]
    %v219 = vld [vmem:[#allocation2 + $0x1a8] sm:$0xff]
    %v220 = vld [vmem:[#allocation2 + $0x1b0] sm:$0xff]
    %v221 = vld [vmem:[#allocation2 + $0x1b8] sm:$0xff]
    %v222 = vld [vmem:[#allocation2 + $0x1c0] sm:$0xff]
    %v223 = vld [vmem:[#allocation2 + $0x1c8] sm:$0xff]
    %v224 = vld [vmem:[#allocation2 + $0x1d0] sm:$0xff]
    %v225 = vld [vmem:[#allocation2 + $0x1d8] sm:$0xff]
    %v226 = vld [vmem:[#allocation2 + $0x1e0] sm:$0xff]
    %v227 = vld [vmem:[#allocation2 + $0x1e8] sm:$0xff]
    %v228 = vld [vmem:[#allocation2 + $0x1f0] sm:$0xff]
    %v229 = vld [vmem:[#allocation2 + $0x1f8] sm:$0xff]
    %v230 = vld [vmem:[%s4] sm:$0x3]
    %v232 = vperm.slane %v230, 0
    %v233 = vperm.slane %v230, 1
    %v300 = vunpack.c.l.b16 %v166
    %v301 = vunpack.c.h.b16 %v166
    %v302 = vunpack.c.l.b16 %v167
    %v303 = vunpack.c.h.b16 %v167
    %v304 = vunpack.c.l.b16 %v168
    %v305 = vunpack.c.h.b16 %v168
    %v306 = vunpack.c.l.b16 %v169
    %v307 = vunpack.c.h.b16 %v169
    %v308 = vunpack.c.l.b16 %v170
    %v309 = vunpack.c.h.b16 %v170
    %v310 = vunpack.c.l.b16 %v171
    %v311 = vunpack.c.h.b16 %v171
    %v312 = vunpack.c.l.b16 %v172
    %v313 = vunpack.c.h.b16 %v172
    %v314 = vunpack.c.l.b16 %v173
    %v315 = vunpack.c.h.b16 %v173
    %v316 = vunpack.c.l.b16 %v174
    %v317 = vunpack.c.h.b16 %v174
    %v318 = vunpack.c.l.b16 %v175
    %v319 = vunpack.c.h.b16 %v175
    %v320 = vunpack.c.l.b16 %v176
    %v321 = vunpack.c.h.b16 %v176
    %v322 = vunpack.c.l.b16 %v177
    %v323 = vunpack.c.h.b16 %v177
    %v324 = vunpack.c.l.b16 %v178
    %v325 = vunpack.c.h.b16 %v178
    %v326 = vunpack.c.l.b16 %v179
    %v327 = vunpack.c.h.b16 %v179
    %v328 = vunpack.c.l.b16 %v180
    %v329 = vunpack.c.h.b16 %v180
    %v330 = vunpack.c.l.b16 %v181
    %v331 = vunpack.c.h.b16 %v181
    %v332 = vunpack.c.l.b16 %v182
    %v333 = vunpack.c.h.b16 %v182
    %v334 = vunpack.c.l.b16 %v183
    %v335 = vunpack.c.h.b16 %v183
    %v336 = vunpack.c.l.b16 %v184
    %v337 = vunpack.c.h.b16 %v184
    %v338 = vunpack.c.l.b16 %v185
    %v339 = vunpack.c.h.b16 %v185
    %v340 = vunpack.c.l.b16 %v186
    %v341 = vunpack.c.h.b16 %v186
    %v342 = vunpack.c.l.b16 %v187
    %v343 = vunpack.c.h.b16 %v187
    %v344 = vunpack.c.l.b16 %v188
    %v345 = vunpack.c.h.b16 %v188
    %v346 = vunpack.c.l.b16 %v189
    %v347 = vunpack.c.h.b16 %v189
    %v348 = vunpack.c.l.b16 %v190
    %v349 = vunpack.c.h.b16 %v190
    %v350 = vunpack.c.l.b16 %v191
    %v351 = vunpack.c.h.b16 %v191
    %v352 = vunpack.c.l.b16 %v192
    %v353 = vunpack.c.h.b16 %v192
    %v354 = vunpack.c.l.b16 %v193
    %v355 = vunpack.c.h.b16 %v193
    %v356 = vunpack.c.l.b16 %v194
    %v357 = vunpack.c.h.b16 %v194
    %v358 = vunpack.c.l.b16 %v195
    %v359 = vunpack.c.h.b16 %v195
    %v360 = vunpack.c.l.b16 %v196
    %v361 = vunpack.c.h.b16 %v196
    %v362 = vunpack.c.l.b16 %v197
    %v363 = vunpack.c.h.b16 %v197
    %v364 = vunpack.c.l.b16 %v198
    %v365 = vunpack.c.h.b16 %v198
    %v366 = vunpack.c.l.b16 %v199
    %v367 = vunpack.c.h.b16 %v199
    %v368 = vunpack.c.l.b16 %v200
    %v369 = vunpack.c.h.b16 %v200
    %v370 = vunpack.c.l.b16 %v201
    %v371 = vunpack.c.h.b16 %v201
    %v372 = vunpack.c.l.b16 %v202
    %v373 = vunpack.c.h.b16 %v202
    %v374 = vunpack.c.l.b16 %v203
    %v375 = vunpack.c.h.b16 %v203
    %v376 = vunpack.c.l.b16 %v204
    %v377 = vunpack.c.h.b16 %v204
    %v378 = vunpack.c.l.b16 %v205
    %v379 = vunpack.c.h.b16 %v205
    %v380 = vunpack.c.l.b16 %v206
    %v381 = vunpack.c.h.b16 %v206
    %v382 = vunpack.c.l.b16 %v207
    %v383 = vunpack.c.h.b16 %v207
    %v384 = vunpack.c.l.b16 %v208
    %v385 = vunpack.c.h.b16 %v208
    %v386 = vunpack.c.l.b16 %v209
    %v387 = vunpack.c.h.b16 %v209
    %v388 = vunpack.c.l.b16 %v210
    %v389 = vunpack.c.h.b16 %v210
    %v390 = vunpack.c.l.b16 %v211
    %v391 = vunpack.c.h.b16 %v211
    %v392 = vunpack.c.l.b16 %v212
    %v393 = vunpack.c.h.b16 %v212
    %v394 = vunpack.c.l.b16 %v213
    %v395 = vunpack.c.h.b16 %v213
    %v396 = vunpack.c.l.b16 %v214
    %v397 = vunpack.c.h.b16 %v214
    %v398 = vunpack.c.l.b16 %v215
    %v399 = vunpack.c.h.b16 %v215
    %v400 = vunpack.c.l.b16 %v216
    %v401 = vunpack.c.h.b16 %v216
    %v402 = vunpack.c.l.b16 %v217
    %v403 = vunpack.c.h.b16 %v217
    %v404 = vunpack.c.l.b16 %v218
    %v405 = vunpack.c.h.b16 %v218
    %v406 = vunpack.c.l.b16 %v219
    %v407 = vunpack.c.h.b16 %v219
    %v408 = vunpack.c.l.b16 %v220
    %v409 = vunpack.c.h.b16 %v220
    %v410 = vunpack.c.l.b16 %v221
    %v411 = vunpack.c.h.b16 %v221
    %v412 = vunpack.c.l.b16 %v222
    %v413 = vunpack.c.h.b16 %v222
    %v414 = vunpack.c.l.b16 %v223
    %v415 = vunpack.c.h.b16 %v223
    %v416 = vunpack.c.l.b16 %v224
    %v417 = vunpack.c.h.b16 %v224
    %v418 = vunpack.c.l.b16 %v225
    %v419 = vunpack.c.h.b16 %v225
    %v420 = vunpack.c.l.b16 %v226
    %v421 = vunpack.c.h.b16 %v226
    %v422 = vunpack.c.l.b16 %v227
    %v423 = vunpack.c.h.b16 %v227
    %v424 = vunpack.c.l.b16 %v228
    %v425 = vunpack.c.h.b16 %v228
    %v426 = vunpack.c.l.b16 %v229
    %v427 = vunpack.c.h.b16 %v229
    %v428 = vpack.c.b16 %v302, %v300
    %v429 = vpack.c.b16 %v303, %v301
    %v430 = vpack.c.b16 %v306, %v304
    %v431 = vpack.c.b16 %v307, %v305
    %v432 = vpack.c.b16 %v310, %v308
    %v433 = vpack.c.b16 %v311, %v309
    %v434 = vpack.c.b16 %v314, %v312
    %v435 = vpack.c.b16 %v315, %v313
    %v436 = vpack.c.b16 %v318, %v316
    %v437 = vpack.c.b16 %v319, %v317
    %v438 = vpack.c.b16 %v322, %v320
    %v439 = vpack.c.b16 %v323, %v321
    %v440 = vpack.c.b16 %v326, %v324
    %v441 = vpack.c.b16 %v327, %v325
    %v442 = vpack.c.b16 %v330, %v328
    %v443 = vpack.c.b16 %v331, %v329
    %v444 = vpack.c.b16 %v334, %v332
    %v445 = vpack.c.b16 %v335, %v333
    %v446 = vpack.c.b16 %v338, %v336
    %v447 = vpack.c.b16 %v339, %v337
    %v448 = vpack.c.b16 %v342, %v340
    %v449 = vpack.c.b16 %v343, %v341
    %v450 = vpack.c.b16 %v346, %v344
    %v451 = vpack.c.b16 %v347, %v345
    %v452 = vpack.c.b16 %v350, %v348
    %v453 = vpack.c.b16 %v351, %v349
    %v454 = vpack.c.b16 %v354, %v352
    %v455 = vpack.c.b16 %v355, %v353
    %v456 = vpack.c.b16 %v358, %v356
    %v457 = vpack.c.b16 %v359, %v357
    %v458 = vpack.c.b16 %v362, %v360
    %v459 = vpack.c.b16 %v363, %v361
    %v460 = vpack.c.b16 %v366, %v364
    %v461 = vpack.c.b16 %v367, %v365
    %v462 = vpack.c.b16 %v370, %v368
    %v463 = vpack.c.b16 %v371, %v369
    %v464 = vpack.c.b16 %v374, %v372
    %v465 = vpack.c.b16 %v375, %v373
    %v466 = vpack.c.b16 %v378, %v376
    %v467 = vpack.c.b16 %v379, %v377
    %v468 = vpack.c.b16 %v382, %v380
    %v469 = vpack.c.b16 %v383, %v381
    %v470 = vpack.c.b16 %v386, %v384
    %v471 = vpack.c.b16 %v387, %v385
    %v472 = vpack.c.b16 %v390, %v388
    %v473 = vpack.c.b16 %v391, %v389
    %v474 = vpack.c.b16 %v394, %v392
    %v475 = vpack.c.b16 %v395, %v393
    %v476 = vpack.c.b16 %v398, %v396
    %v477 = vpack.c.b16 %v399, %v397
    %v478 = vpack.c.b16 %v402, %v400
    %v479 = vpack.c.b16 %v403, %v401
    %v480 = vpack.c.b16 %v406, %v404
    %v481 = vpack.c.b16 %v407, %v405
    %v482 = vpack.c.b16 %v410, %v408
    %v483 = vpack.c.b16 %v411, %v409
    %v484 = vpack.c.b16 %v414, %v412
    %v485 = vpack.c.b16 %v415, %v413
    %v486 = vpack.c.b16 %v418, %v416
    %v487 = vpack.c.b16 %v419, %v417
    %v488 = vpack.c.b16 %v422, %v420
    %v489 = vpack.c.b16 %v423, %v421
    %v490 = vpack.c.b16 %v426, %v424
    %v491 = vpack.c.b16 %v427, %v425
    %556 = vmatpush.bf16.msra.mxu0 %v442
    %557 = vmatpush.bf16.msra.mxu0 %v440
    %558 = vmatpush.bf16.msra.mxu0 %v438
    %559 = vmatpush.bf16.msra.mxu0 %v436
    %560 = vmatpush.bf16.msra.mxu0 %v434
    %561 = vmatpush.bf16.msra.mxu0 %v432
    %562 = vmatpush.bf16.msra.mxu0 %v430
    %563 = vmatpush.bf16.msra.mxu0 %v428
    %564 = vmatmul.bf16.gmra.mxu0 %v162
    %v565 = vpop.f32.mrf.mxu0
    %v566 = vadd.f32 %v232, %v565
    %v567 = vpop.f32.mrf.mxu0
    %568 = vdwg.mxu0
    %569 = vmatpush.bf16.msra.mxu0 %v458
    %570 = vmatpush.bf16.msra.mxu0 %v456
    %571 = vmatpush.bf16.msra.mxu0 %v454
    %572 = vmatpush.bf16.msra.mxu0 %v452
    %573 = vmatpush.bf16.msra.mxu0 %v450
    %574 = vmatpush.bf16.msra.mxu0 %v448
    %575 = vmatpush.bf16.msra.mxu0 %v446
    %576 = vmatpush.bf16.msra.mxu0 %v444
    %577 = vmatmul.bf16.gmra.mxu0 %v163
    %v578 = vpop.f32.mrf.mxu0
    %v579 = vadd.f32 %v566, %v578
    %v580 = vpop.f32.mrf.mxu0
    %581 = vdwg.mxu0
    %582 = vmatpush.bf16.msra.mxu0 %v474
    %583 = vmatpush.bf16.msra.mxu0 %v472
    %584 = vmatpush.bf16.msra.mxu0 %v470
    %585 = vmatpush.bf16.msra.mxu0 %v468
    %586 = vmatpush.bf16.msra.mxu0 %v466
    %587 = vmatpush.bf16.msra.mxu0 %v464
    %588 = vmatpush.bf16.msra.mxu0 %v462
    %589 = vmatpush.bf16.msra.mxu0 %v460
    %590 = vmatmul.bf16.gmra.mxu0 %v164
    %v591 = vpop.f32.mrf.mxu0
    %v592 = vadd.f32 %v579, %v591
    %v593 = vpop.f32.mrf.mxu0
    %594 = vdwg.mxu0
    %595 = vmatpush.bf16.msra.mxu0 %v490
    %596 = vmatpush.bf16.msra.mxu0 %v488
    %597 = vmatpush.bf16.msra.mxu0 %v486
    %598 = vmatpush.bf16.msra.mxu0 %v484
    %599 = vmatpush.bf16.msra.mxu0 %v482
    %600 = vmatpush.bf16.msra.mxu0 %v480
    %601 = vmatpush.bf16.msra.mxu0 %v478
    %602 = vmatpush.bf16.msra.mxu0 %v476
    %603 = vmatmul.bf16.gmra.mxu0 %v165
    %v604 = vpop.f32.mrf.mxu0
    %v605 = vadd.f32 %v592, %v604
    %v606 = vpop.f32.mrf.mxu0
    %607 = vdwg.mxu0
    %608 = vmatpush.bf16.msra.mxu0 %v443
    %609 = vmatpush.bf16.msra.mxu0 %v441
    %610 = vmatpush.bf16.msra.mxu0 %v439
    %611 = vmatpush.bf16.msra.mxu0 %v437
    %612 = vmatpush.bf16.msra.mxu0 %v435
    %613 = vmatpush.bf16.msra.mxu0 %v433
    %614 = vmatpush.bf16.msra.mxu0 %v431
    %615 = vmatpush.bf16.msra.mxu0 %v429
    %616 = vmatmul.bf16.gmra.mxu0 %v162
    %v617 = vpop.f32.mrf.mxu0
    %v618 = vadd.f32 %v233, %v617
    %v619 = vpop.f32.mrf.mxu0
    %620 = vdwg.mxu0
    %621 = vmatpush.bf16.msra.mxu0 %v459
    %622 = vmatpush.bf16.msra.mxu0 %v457
    %623 = vmatpush.bf16.msra.mxu0 %v455
    %624 = vmatpush.bf16.msra.mxu0 %v453
    %625 = vmatpush.bf16.msra.mxu0 %v451
    %626 = vmatpush.bf16.msra.mxu0 %v449
    %627 = vmatpush.bf16.msra.mxu0 %v447
    %628 = vmatpush.bf16.msra.mxu0 %v445
    %629 = vmatmul.bf16.gmra.mxu0 %v163
    %v630 = vpop.f32.mrf.mxu0
    %v631 = vadd.f32 %v618, %v630
    %v632 = vpop.f32.mrf.mxu0
    %633 = vdwg.mxu0
    %634 = vmatpush.bf16.msra.mxu0 %v475
    %635 = vmatpush.bf16.msra.mxu0 %v473
    %636 = vmatpush.bf16.msra.mxu0 %v471
    %637 = vmatpush.bf16.msra.mxu0 %v469
    %638 = vmatpush.bf16.msra.mxu0 %v467
    %639 = vmatpush.bf16.msra.mxu0 %v465
    %640 = vmatpush.bf16.msra.mxu0 %v463
    %641 = vmatpush.bf16.msra.mxu0 %v461
    %642 = vmatmul.bf16.gmra.mxu0 %v164
    %v643 = vpop.f32.mrf.mxu0
    %v644 = vadd.f32 %v631, %v643
    %v645 = vpop.f32.mrf.mxu0
    %646 = vdwg.mxu0
    %647 = vmatpush.bf16.msra.mxu0 %v491
    %648 = vmatpush.bf16.msra.mxu0 %v489
    %649 = vmatpush.bf16.msra.mxu0 %v487
    %650 = vmatpush.bf16.msra.mxu0 %v485
    %651 = vmatpush.bf16.msra.mxu0 %v483
    %652 = vmatpush.bf16.msra.mxu0 %v481
    %653 = vmatpush.bf16.msra.mxu0 %v479
    %654 = vmatpush.bf16.msra.mxu0 %v477
    %655 = vmatmul.bf16.gmra.mxu0 %v165
    %v656 = vpop.f32.mrf.mxu0
    %v657 = vadd.f32 %v644, %v656
    %v658 = vpop.f32.mrf.mxu0
    %659 = vdwg.mxu0
    %v660 = vmax.f32 %v605, 0.0
    %v661 = vmax.f32 %v657, 0.0
    %v662 = vpack.c.bf16 %v660, %v660
    %v663 = vpack.c.bf16 %v661, %v661
    %v664 = vld [vmem:[#allocation4] sm:$0xff]
    %v665 = vld [vmem:[#allocation4 + $0x8] sm:$0xff]
    %v666 = vld [vmem:[#allocation4 + $0x10] sm:$0xff]
    %v667 = vld [vmem:[#allocation4 + $0x18] sm:$0xff]
    %v668 = vld [vmem:[#allocation4 + $0x20] sm:$0xff]
    %v669 = vld [vmem:[#allocation4 + $0x28] sm:$0xff]
    %v670 = vld [vmem:[#allocation4 + $0x30] sm:$0xff]
    %v671 = vld [vmem:[#allocation4 + $0x38] sm:$0xff]
    %v672 = vld [vmem:[#allocation4 + $0x40] sm:$0xff]
    %v673 = vld [vmem:[#allocation4 + $0x48] sm:$0xff]
    %v674 = vld [vmem:[#allocation4 + $0x50] sm:$0xff]
    %v675 = vld [vmem:[#allocation4 + $0x58] sm:$0xff]
    %v676 = vld [vmem:[#allocation4 + $0x60] sm:$0xff]
    %v677 = vld [vmem:[#allocation4 + $0x68] sm:$0xff]
    %v678 = vld [vmem:[#allocation4 + $0x70] sm:$0xff]
    %v679 = vld [vmem:[#allocation4 + $0x78] sm:$0xff]
    %v680 = vld [vmem:[#allocation4 + $0x80] sm:$0xff]
    %v681 = vld [vmem:[#allocation4 + $0x88] sm:$0xff]
    %v682 = vld [vmem:[#allocation4 + $0x90] sm:$0xff]
    %v683 = vld [vmem:[#allocation4 + $0x98] sm:$0xff]
    %v684 = vld [vmem:[#allocation4 + $0xa0] sm:$0xff]
    %v685 = vld [vmem:[#allocation4 + $0xa8] sm:$0xff]
    %v686 = vld [vmem:[#allocation4 + $0xb0] sm:$0xff]
    %v687 = vld [vmem:[#allocation4 + $0xb8] sm:$0xff]
    %v688 = vld [vmem:[#allocation4 + $0xc0] sm:$0xff]
    %v689 = vld [vmem:[#allocation4 + $0xc8] sm:$0xff]
    %v690 = vld [vmem:[#allocation4 + $0xd0] sm:$0xff]
    %v691 = vld [vmem:[#allocation4 + $0xd8] sm:$0xff]
    %v692 = vld [vmem:[#allocation4 + $0xe0] sm:$0xff]
    %v693 = vld [vmem:[#allocation4 + $0xe8] sm:$0xff]
    %v694 = vld [vmem:[#allocation4 + $0xf0] sm:$0xff]
    %v695 = vld [vmem:[#allocation4 + $0xf8] sm:$0xff]
    %v696 = vld [vmem:[%s6] sm:$0x3]
    %v698 = vperm.slane %v696, 0
    %v699 = vperm.slane %v696, 1
    %v734 = vunpack.c.l.b16 %v664
    %v735 = vunpack.c.h.b16 %v664
    %v736 = vunpack.c.l.b16 %v665
    %v737 = vunpack.c.h.b16 %v665
    %v738 = vunpack.c.l.b16 %v666
    %v739 = vunpack.c.h.b16 %v666
    %v740 = vunpack.c.l.b16 %v667
    %v741 = vunpack.c.h.b16 %v667
    %v742 = vunpack.c.l.b16 %v668
    %v743 = vunpack.c.h.b16 %v668
    %v744 = vunpack.c.l.b16 %v669
    %v745 = vunpack.c.h.b16 %v669
    %v746 = vunpack.c.l.b16 %v670
    %v747 = vunpack.c.h.b16 %v670
    %v748 = vunpack.c.l.b16 %v671
    %v749 = vunpack.c.h.b16 %v671
    %v750 = vunpack.c.l.b16 %v672
    %v751 = vunpack.c.h.b16 %v672
    %v752 = vunpack.c.l.b16 %v673
    %v753 = vunpack.c.h.b16 %v673
    %v754 = vunpack.c.l.b16 %v674
    %v755 = vunpack.c.h.b16 %v674
    %v756 = vunpack.c.l.b16 %v675
    %v757 = vunpack.c.h.b16 %v675
    %v758 = vunpack.c.l.b16 %v676
    %v759 = vunpack.c.h.b16 %v676
    %v760 = vunpack.c.l.b16 %v677
    %v761 = vunpack.c.h.b16 %v677
    %v762 = vunpack.c.l.b16 %v678
    %v763 = vunpack.c.h.b16 %v678
    %v764 = vunpack.c.l.b16 %v679
    %v765 = vunpack.c.h.b16 %v679
    %v766 = vunpack.c.l.b16 %v680
    %v767 = vunpack.c.h.b16 %v680
    %v768 = vunpack.c.l.b16 %v681
    %v769 = vunpack.c.h.b16 %v681
    %v770 = vunpack.c.l.b16 %v682
    %v771 = vunpack.c.h.b16 %v682
    %v772 = vunpack.c.l.b16 %v683
    %v773 = vunpack.c.h.b16 %v683
    %v774 = vunpack.c.l.b16 %v684
    %v775 = vunpack.c.h.b16 %v684
    %v776 = vunpack.c.l.b16 %v685
    %v777 = vunpack.c.h.b16 %v685
    %v778 = vunpack.c.l.b16 %v686
    %v779 = vunpack.c.h.b16 %v686
    %v780 = vunpack.c.l.b16 %v687
    %v781 = vunpack.c.h.b16 %v687
    %v782 = vunpack.c.l.b16 %v688
    %v783 = vunpack.c.h.b16 %v688
    %v784 = vunpack.c.l.b16 %v689
    %v785 = vunpack.c.h.b16 %v689
    %v786 = vunpack.c.l.b16 %v690
    %v787 = vunpack.c.h.b16 %v690
    %v788 = vunpack.c.l.b16 %v691
    %v789 = vunpack.c.h.b16 %v691
    %v790 = vunpack.c.l.b16 %v692
    %v791 = vunpack.c.h.b16 %v692
    %v792 = vunpack.c.l.b16 %v693
    %v793 = vunpack.c.h.b16 %v693
    %v794 = vunpack.c.l.b16 %v694
    %v795 = vunpack.c.h.b16 %v694
    %v796 = vunpack.c.l.b16 %v695
    %v797 = vunpack.c.h.b16 %v695
    %v798 = vpack.c.b16 %v736, %v734
    %v799 = vpack.c.b16 %v737, %v735
    %v800 = vpack.c.b16 %v740, %v738
    %v801 = vpack.c.b16 %v741, %v739
    %v802 = vpack.c.b16 %v744, %v742
    %v803 = vpack.c.b16 %v745, %v743
    %v804 = vpack.c.b16 %v748, %v746
    %v805 = vpack.c.b16 %v749, %v747
    %v806 = vpack.c.b16 %v752, %v750
    %v807 = vpack.c.b16 %v753, %v751
    %v808 = vpack.c.b16 %v756, %v754
    %v809 = vpack.c.b16 %v757, %v755
    %v810 = vpack.c.b16 %v760, %v758
    %v811 = vpack.c.b16 %v761, %v759
    %v812 = vpack.c.b16 %v764, %v762
    %v813 = vpack.c.b16 %v765, %v763
    %v814 = vpack.c.b16 %v768, %v766
    %v815 = vpack.c.b16 %v769, %v767
    %v816 = vpack.c.b16 %v772, %v770
    %v817 = vpack.c.b16 %v773, %v771
    %v818 = vpack.c.b16 %v776, %v774
    %v819 = vpack.c.b16 %v777, %v775
    %v820 = vpack.c.b16 %v780, %v778
    %v821 = vpack.c.b16 %v781, %v779
    %v822 = vpack.c.b16 %v784, %v782
    %v823 = vpack.c.b16 %v785, %v783
    %v824 = vpack.c.b16 %v788, %v786
    %v825 = vpack.c.b16 %v789, %v787
    %v826 = vpack.c.b16 %v792, %v790
    %v827 = vpack.c.b16 %v793, %v791
    %v828 = vpack.c.b16 %v796, %v794
    %v829 = vpack.c.b16 %v797, %v795
    %862 = vmatpush.bf16.msra.mxu0 %v812
    %863 = vmatpush.bf16.msra.mxu0 %v810
    %864 = vmatpush.bf16.msra.mxu0 %v808
    %865 = vmatpush.bf16.msra.mxu0 %v806
    %866 = vmatpush.bf16.msra.mxu0 %v804
    %867 = vmatpush.bf16.msra.mxu0 %v802
    %868 = vmatpush.bf16.msra.mxu0 %v800
    %869 = vmatpush.bf16.msra.mxu0 %v798
    %870 = vmatmul.bf16.gmra.mxu0 %v662
    %v871 = vpop.f32.mrf.mxu0
    %v872 = vadd.f32 %v698, %v871
    %v873 = vpop.f32.mrf.mxu0
    %874 = vdwg.mxu0
    %875 = vmatpush.bf16.msra.mxu0 %v828
    %876 = vmatpush.bf16.msra.mxu0 %v826
    %877 = vmatpush.bf16.msra.mxu0 %v824
    %878 = vmatpush.bf16.msra.mxu0 %v822
    %879 = vmatpush.bf16.msra.mxu0 %v820
    %880 = vmatpush.bf16.msra.mxu0 %v818
    %881 = vmatpush.bf16.msra.mxu0 %v816
    %882 = vmatpush.bf16.msra.mxu0 %v814
    %883 = vmatmul.bf16.gmra.mxu0 %v663
    %v884 = vpop.f32.mrf.mxu0
    %v885 = vadd.f32 %v872, %v884
    %v886 = vpop.f32.mrf.mxu0
    %887 = vdwg.mxu0
    %888 = vmatpush.bf16.msra.mxu0 %v813
    %889 = vmatpush.bf16.msra.mxu0 %v811
    %890 = vmatpush.bf16.msra.mxu0 %v809
    %891 = vmatpush.bf16.msra.mxu0 %v807
    %892 = vmatpush.bf16.msra.mxu0 %v805
    %893 = vmatpush.bf16.msra.mxu0 %v803
    %894 = vmatpush.bf16.msra.mxu0 %v801
    %895 = vmatpush.bf16.msra.mxu0 %v799
    %896 = vmatmul.bf16.gmra.mxu0 %v662
    %v897 = vpop.f32.mrf.mxu0
    %v898 = vadd.f32 %v699, %v897
    %v899 = vpop.f32.mrf.mxu0
    %900 = vdwg.mxu0
    %901 = vmatpush.bf16.msra.mxu0 %v829
    %902 = vmatpush.bf16.msra.mxu0 %v827
    %903 = vmatpush.bf16.msra.mxu0 %v825
    %904 = vmatpush.bf16.msra.mxu0 %v823
    %905 = vmatpush.bf16.msra.mxu0 %v821
    %906 = vmatpush.bf16.msra.mxu0 %v819
    %907 = vmatpush.bf16.msra.mxu0 %v817
    %908 = vmatpush.bf16.msra.mxu0 %v815
    %909 = vmatmul.bf16.gmra.mxu0 %v663
    %v910 = vpop.f32.mrf.mxu0
    %v911 = vadd.f32 %v898, %v910
    %v912 = vpop.f32.mrf.mxu0
    %913 = vdwg.mxu0
    %v914 = vmax.f32 %v885, 0.0
    %v915 = vmax.f32 %v911, 0.0
    %v916 = vpack.c.bf16 %v914, %v914
    %v917 = vpack.c.bf16 %v915, %v915
    %v918 = vld [vmem:[%s7] sm:$0xf]
    %v919 = vld [vmem:[%s7 + $0x4] sm:$0xf]
    %v920 = vld [vmem:[%s7 + $0x8] sm:$0xf]
    %v921 = vld [vmem:[%s7 + $0xc] sm:$0xf]
    %v922 = vld [vmem:[%s7 + $0x10] sm:$0xf]
    %v923 = vld [vmem:[%s7 + $0x14] sm:$0xf]
    %v924 = vld [vmem:[%s7 + $0x18] sm:$0xf]
    %v925 = vld [vmem:[%s7 + $0x1c] sm:$0xf]
    %v926 = vld [vmem:[%s7 + $0x20] sm:$0xf]
    %v927 = vld [vmem:[%s7 + $0x24] sm:$0xf]
    %v928 = vld [vmem:[%s7 + $0x28] sm:$0xf]
    %v929 = vld [vmem:[%s7 + $0x2c] sm:$0xf]
    %v930 = vld [vmem:[%s7 + $0x30] sm:$0xf]
    %v931 = vld [vmem:[%s7 + $0x34] sm:$0xf]
    %v932 = vld [vmem:[%s7 + $0x38] sm:$0xf]
    %v933 = vld [vmem:[%s7 + $0x3c] sm:$0xf]
    %v934 = vld [vmem:[%s7 + $0x40] sm:$0xf]
    %v935 = vld [vmem:[%s7 + $0x44] sm:$0xf]
    %v936 = vld [vmem:[%s7 + $0x48] sm:$0xf]
    %v937 = vld [vmem:[%s7 + $0x4c] sm:$0xf]
    %v938 = vld [vmem:[%s7 + $0x50] sm:$0xf]
    %v939 = vld [vmem:[%s7 + $0x54] sm:$0xf]
    %v940 = vld [vmem:[%s7 + $0x58] sm:$0xf]
    %v941 = vld [vmem:[%s7 + $0x5c] sm:$0xf]
    %v942 = vld [vmem:[%s7 + $0x60] sm:$0xf]
    %v943 = vld [vmem:[%s7 + $0x64] sm:$0xf]
    %v944 = vld [vmem:[%s7 + $0x68] sm:$0xf]
    %v945 = vld [vmem:[%s7 + $0x6c] sm:$0xf]
    %v946 = vld [vmem:[%s7 + $0x70] sm:$0xf]
    %v947 = vld [vmem:[%s7 + $0x74] sm:$0xf]
    %v948 = vld [vmem:[%s7 + $0x78] sm:$0xf]
    %v949 = vld [vmem:[%s7 + $0x7c] sm:$0xf]
    %v950 = vld [vmem:[%s8] sm:$0x1]
    %v952 = vperm.slane %v950, 0
    %v986 = vunpack.c.l.b16 %v918
    %v987 = vunpack.c.l.b16 %v919
    %v988 = vunpack.c.l.b16 %v920
    %v989 = vunpack.c.l.b16 %v921
    %v990 = vunpack.c.l.b16 %v922
    %v991 = vunpack.c.l.b16 %v923
    %v992 = vunpack.c.l.b16 %v924
    %v993 = vunpack.c.l.b16 %v925
    %v994 = vunpack.c.l.b16 %v926
    %v995 = vunpack.c.l.b16 %v927
    %v996 = vunpack.c.l.b16 %v928
    %v997 = vunpack.c.l.b16 %v929
    %v998 = vunpack.c.l.b16 %v930
    %v999 = vunpack.c.l.b16 %v931
    %v1000 = vunpack.c.l.b16 %v932
    %v1001 = vunpack.c.l.b16 %v933
    %v1002 = vunpack.c.l.b16 %v934
    %v1003 = vunpack.c.l.b16 %v935
    %v1004 = vunpack.c.l.b16 %v936
    %v1005 = vunpack.c.l.b16 %v937
    %v1006 = vunpack.c.l.b16 %v938
    %v1007 = vunpack.c.l.b16 %v939
    %v1008 = vunpack.c.l.b16 %v940
    %v1009 = vunpack.c.l.b16 %v941
    %v1010 = vunpack.c.l.b16 %v942
    %v1011 = vunpack.c.l.b16 %v943
    %v1012 = vunpack.c.l.b16 %v944
    %v1013 = vunpack.c.l.b16 %v945
    %v1014 = vunpack.c.l.b16 %v946
    %v1015 = vunpack.c.l.b16 %v947
    %v1016 = vunpack.c.l.b16 %v948
    %v1017 = vunpack.c.l.b16 %v949
    %v1018 = vpack.c.b16 %v987, %v986
    %v1019 = vpack.c.b16 %v989, %v988
    %v1020 = vpack.c.b16 %v991, %v990
    %v1021 = vpack.c.b16 %v993, %v992
    %v1022 = vpack.c.b16 %v995, %v994
    %v1023 = vpack.c.b16 %v997, %v996
    %v1024 = vpack.c.b16 %v999, %v998
    %v1025 = vpack.c.b16 %v1001, %v1000
    %v1026 = vpack.c.b16 %v1003, %v1002
    %v1027 = vpack.c.b16 %v1005, %v1004
    %v1028 = vpack.c.b16 %v1007, %v1006
    %v1029 = vpack.c.b16 %v1009, %v1008
    %v1030 = vpack.c.b16 %v1011, %v1010
    %v1031 = vpack.c.b16 %v1013, %v1012
    %v1032 = vpack.c.b16 %v1015, %v1014
    %v1033 = vpack.c.b16 %v1017, %v1016
    %1050 = vmatpush.bf16.msra.mxu0 %v1025
    %1051 = vmatpush.bf16.msra.mxu0 %v1024
    %1052 = vmatpush.bf16.msra.mxu0 %v1023
    %1053 = vmatpush.bf16.msra.mxu0 %v1022
    %1054 = vmatpush.bf16.msra.mxu0 %v1021
    %1055 = vmatpush.bf16.msra.mxu0 %v1020
    %1056 = vmatpush.bf16.msra.mxu0 %v1019
    %1057 = vmatpush.bf16.msra.mxu0 %v1018
    %1058 = vmatmul.bf16.gmra.mxu0 %v916
    %v1059 = vpop.f32.mrf.mxu0
    %v1060 = vadd.f32 %v952, %v1059
    %v1061 = vpop.f32.mrf.mxu0
    %1062 = vdwg.mxu0
    %1063 = vmatpush.bf16.msra.mxu0 %v1033
    %1064 = vmatpush.bf16.msra.mxu0 %v1032
    %1065 = vmatpush.bf16.msra.mxu0 %v1031
    %1066 = vmatpush.bf16.msra.mxu0 %v1030
    %1067 = vmatpush.bf16.msra.mxu0 %v1029
    %1068 = vmatpush.bf16.msra.mxu0 %v1028
    %1069 = vmatpush.bf16.msra.mxu0 %v1027
    %1070 = vmatpush.bf16.msra.mxu0 %v1026
    %1071 = vmatmul.bf16.gmra.mxu0 %v917
    %v1072 = vpop.f32.mrf.mxu0
    %v1073 = vadd.f32 %v1060, %v1072
    %v1074 = vpop.f32.mrf.mxu0
    %1075 = vdwg.mxu0
    %v1076 = vtanh.pop %v1073
    %vm1077 = vcmask 15360
    %1078 = vst.msk [vmem:[%s9] sm:$0xff] %vm1077, %v1076
    // Predicated region
    $region46: #{tpu_custom_call.1} parent=1 // pred_check
      _
    $region47: #{tpu_custom_call.1} parent=1 // pred_check_branch
      %1080 = sbr.rel (0) target = $region49
    $region48: #{tpu_custom_call.1} parent=1 // pred_region
      _
    $region49: #{tpu_custom_call.1} parent=1 // pred_fallthru
      _
    // Predicated region
    $region50: #{tpu_custom_call.1} parent=1 // pred_check
      _
    $region51: #{tpu_custom_call.1} parent=1 // pred_check_branch
      %1082 = sbr.rel (0) target = $region53
    $region52: #{tpu_custom_call.1} parent=1 // pred_region
      _
    $region53: #{tpu_custom_call.1} parent=1 // pred_fallthru
      _
    %1083 = vsyncpa [#allocation3], 1
    %1084 = vsyncpa [#allocation5], 1

</llo_original>
